<compile_context>
chip_gen: v7x
topology: tpu7x:2x2x1
jax: 0.10.0
libtpu: 0.0.40
codegen_flags: <defaults>
</compile_context>

<pallas_src>
import functools
import math

import jax
import jax.numpy as jnp
from jax.experimental import pallas as pl
from jax.experimental.pallas import tpu as pltpu


def _largest_divisor_leq(n, k):
    k = max(1, min(int(k), int(n)))
    while n % k != 0:
        k -= 1
    return k


# ---------------------------------------------------------------------------
# Parameter packing (done ONCE, outside the recurrence).
# ---------------------------------------------------------------------------
def prepare_params(W_01, U_11, U_21, bias, *, hidden_size, last_layer):
    """Pack module params into the fused layouts used by the kernel.

    wpack : (Kx, SLAB)  Kx = bottom (+ top) + 1 (the +1 column routes z_bottom)
            columns: [gates from h_bottom (+bias via bpack) | gates from h_top |
                      scalar block {rz, tz, zb, 0...}]
    bpack : (1, SLAB)   gate bias + boundary bias, aligned with wpack columns
    u11g  : (H, 4H)     recurrent gate weights (U_11 gates, transposed)
    u11z  : (1, H)      recurrent boundary row of U_11
    """
    H = hidden_size
    G = 4 * H
    bottom = W_01.shape[1]
    top = 0 if last_layer else U_21.shape[1]
    GW = G if last_layer else 2 * G          # width of the gate region
    SLAB = GW + 128                          # + 128-lane scalar block (rz,tz,zb)
    Kx = bottom + top + 1

    bias = jnp.reshape(bias, (-1,)).astype(jnp.float32)
    W_01 = W_01.astype(jnp.float32)
    U_11 = U_11.astype(jnp.float32)

    wpack = jnp.zeros((Kx, SLAB), jnp.float32)
    wpack = wpack.at[0:bottom, 0:G].set(W_01[:G, :].T)
    wpack = wpack.at[0:bottom, GW].set(W_01[G, :])            # boundary row -> lane GW
    if not last_layer:
        U_21 = U_21.astype(jnp.float32)
        wpack = wpack.at[bottom:bottom + top, G:2 * G].set(U_21[:G, :].T)
        wpack = wpack.at[bottom:bottom + top, GW + 1].set(U_21[G, :])
    wpack = wpack.at[Kx - 1, GW + 2].set(1.0)                 # z_bottom passthrough

    bpack = jnp.zeros((1, SLAB), jnp.float32)
    bpack = bpack.at[0, 0:G].set(bias[:G])
    bpack = bpack.at[0, GW].set(bias[G])

    u11g = jnp.transpose(U_11[:G, :])        # (H, 4H)
    u11z = U_11[G:G + 1, :]                  # (1, H)

    # NOTE: on v6e/v7x, wpack / u11g could be stored bf16 (f32 accumulation via
    # preferred_element_type keeps accuracy); kept f32 so v5e needs no VPU converts.
    return dict(wpack=wpack, bpack=bpack, u11g=u11g, u11z=u11z)


# ---------------------------------------------------------------------------
# Fused-sequence kernel: the whole recurrence in one pallas_call.
# ---------------------------------------------------------------------------
def _hm_seq_kernel(a, H, TS, last_layer, *refs):
    (wpack_ref, bpack_ref, u11g_ref, u11z_ref,
     c0_ref, h0_ref, z0_ref, xa_ref,
     hz_ref, c_final_ref,
     c_scr, h_scr, z_scr) = refs

    G = 4 * H
    GW = G if last_layer else 2 * G
    B = c0_ref.shape[0]
    OW = hz_ref.shape[-1]

    tb = pl.program_id(0)

    @pl.when(tb == 0)
    def _():
        c_scr[...] = c0_ref[...]
        h_scr[...] = h0_ref[...]
        z_scr[...] = z0_ref[...]

    # Hoisted, recurrence-independent matmul for the whole time block:
    #   [h_bottom | h_top | z_bottom] @ wpack + bpack
    # -> per step: gates from bottom (+bias), gates from top, and {rz, tz, zb}.
    pre = jnp.dot(xa_ref[...], wpack_ref[...],
                  preferred_element_type=jnp.float32) + bpack_ref[...]

    u11g = u11g_ref[...]          # (H, 4H)
    u11z = u11z_ref[...]          # (1, H)

    c = c_scr[...]
    h = h_scr[...]
    z = z_scr[...]

    pad_w = OW - (H + 1)
    pad = jnp.zeros((B, pad_w), jnp.float32) if pad_w > 0 else None  # hoisted

    rows = []
    # TS is small & static: unrolled loop, c/h/z carried as register values.
    for s in range(TS):
        blk = pre[s * B:(s + 1) * B, :]           # (B, SLAB), sublane-aligned
        gA = blk[:, 0:G]                          # W_01 @ h_bottom + bias (gates)
        rz = blk[:, GW:GW + 1]                    # boundary row of the above
        zb = blk[:, GW + 2:GW + 3]                # z_bottom (routed via wpack)

        # Recurrent bottom-up path: zb * (U_11 @ h).
        bu = jnp.dot(h, u11g, preferred_element_type=jnp.float32)      # (B, 4H)
        bu_z = jnp.sum(h * u11z, axis=1, keepdims=True)                # (B, 1)

        fs = gA + zb * bu
        fz = rz + zb * bu_z
        if not last_layer:
            gT = blk[:, G:2 * G]                  # U_21 @ h_top (gates)
            tz = blk[:, GW + 1:GW + 2]
            fs = fs + z * gT
            fz = fz + z * tz

        sig = jax.nn.sigmoid(fs[:, 0:3 * H])      # one fused EUP pass for f,i,o
        f = sig[:, 0:H]
        i = sig[:, H:2 * H]
        o = sig[:, 2 * H:3 * H]
        g = jnp.tanh(fs[:, 3 * H:4 * H])

        ig = i * g
        omz = 1.0 - z
        copy_ = omz * (1.0 - zb)                  # (1-z)(1-zb): COPY
        flush = omz * zb                          # (1-z)zb    : UPDATE
        c = z * ig + copy_ * c + flush * (f * c + ig)
        h = (z + flush) * (o * jnp.tanh(c)) + copy_ * h
        z_hat = jnp.clip((a * fz + 1.0) * 0.5, 0.0, 1.0)
        z = (z_hat > 0.5).astype(jnp.float32)

        parts = [h, z] if pad is None else [h, z, pad]
        rows.append(jnp.concatenate(parts, axis=1))   # lane-dense (B, OW) row

    # One lane-dense (TS, B, OW) store per grid step.
    hz_ref[...] = jnp.stack(rows, axis=0)

    # Carry the recurrence purely in VMEM scratch.
    c_scr[...] = c
    h_scr[...] = h
    z_scr[...] = z

    @pl.when(tb == pl.num_programs(0) - 1)
    def _():
        c_final_ref[...] = c


# ---------------------------------------------------------------------------
# Wrappers
# ---------------------------------------------------------------------------
def hm_lstm_sequence(prep, c0T, h0T, z0T, hb_seq, zb_seq, ht_seq=None, *,
                     a, hidden_size, last_layer, time_block=4):
    """Run the cell over a whole sequence inside ONE pallas_call.

    Transposed layouts:
      c0T, h0T: (B, H)   z0T: (B, 1)
      hb_seq: (T, B, bottom)  zb_seq: (T, B, 1)  ht_seq: (T, B, top) | None
    Returns h_seq (T, B, H), z_seq (T, B, 1), c_final (B, H).
    """
    wpack = prep["wpack"]
    bpack = prep["bpack"]
    u11g = prep["u11g"]
    u11z = prep["u11z"]

    H = hidden_size
    G = 4 * H
    T, B, _ = hb_seq.shape
    Kx, SLAB = wpack.shape
    TS = _largest_divisor_leq(T, time_block)
    OW = ((H + 1 + 127) // 128) * 128            # lane-dense per-step output

    if last_layer:
        xa = jnp.concatenate([hb_seq, zb_seq], axis=-1)
    else:
        xa = jnp.concatenate([hb_seq, ht_seq, zb_seq], axis=-1)
    xa = xa.reshape(T * B, Kx).astype(jnp.float32)

    const2 = lambda tb: (0, 0)
    in_specs = [
        pl.BlockSpec(tuple(wpack.shape), const2),    # resident weights
        pl.BlockSpec(tuple(bpack.shape), const2),
        pl.BlockSpec(tuple(u11g.shape), const2),
        pl.BlockSpec(tuple(u11z.shape), const2),
        pl.BlockSpec((B, H), const2),                # resident initial state
        pl.BlockSpec((B, H), const2),
        pl.BlockSpec((B, 1), const2),
        pl.BlockSpec((TS * B, Kx), lambda tb: (tb, 0)),  # one streamed slab/block
    ]
    out_shape = (jax.ShapeDtypeStruct((T, B, OW), jnp.float32),  # [h | z | pad]
                 jax.ShapeDtypeStruct((B, H), jnp.float32))      # final c
    out_specs = (pl.BlockSpec((TS, B, OW), lambda tb: (tb, 0, 0)),
                 pl.BlockSpec((B, H), const2))

    cost = pl.CostEstimate(
        flops=int(2 * T * B * (Kx * SLAB + H * G) + 24 * T * B * H),
        transcendentals=int(5 * T * B * H),
        bytes_accessed=int(4 * (wpack.size + bpack.size + u11g.size + u11z.size
                                + 2 * B * H + B
                                + T * B * Kx + T * B * OW + B * H)),
    )

    hz_seq, c_final = pl.pallas_call(
        functools.partial(_hm_seq_kernel, float(a), H, TS, last_layer),
        grid=(T // TS,),
        out_shape=out_shape,
        in_specs=in_specs,
        out_specs=out_specs,
        scratch_shapes=[pltpu.VMEM((B, H), jnp.float32),   # c carry
                        pltpu.VMEM((B, H), jnp.float32),   # h carry
                        pltpu.VMEM((B, 1), jnp.float32)],  # z carry
        compiler_params=pltpu.CompilerParams(
            dimension_semantics=("arbitrary",)),
        cost_estimate=cost,
    )(wpack, bpack, u11g, u11z,
      c0T.astype(jnp.float32), h0T.astype(jnp.float32), z0T.astype(jnp.float32),
      xa)

    return hz_seq[..., :H], hz_seq[..., H:H + 1], c_final


def hm_lstm_cell(prep, c, h_bottom, h, h_top, z, z_bottom, *,
                 a, hidden_size, last_layer):
    """Single HM_LSTMCell.forward step; module layout [features, batch].

    # TODO(synk): the module-layout compat path pays wrapper-side transposes;
    # prefer hm_lstm_sequence (transposed layout) for hot paths.
    """
    hb_seq = h_bottom.T[None]
    zb_seq = z_bottom.T[None]
    ht_seq = None if last_layer else h_top.T[None]
    h_seq, z_seq, c_final = hm_lstm_sequence(
        prep, c.T, h.T, z.T, hb_seq, zb_seq, ht_seq,
        a=a, hidden_size=hidden_size, last_layer=last_layer, time_block=1)
    return h_seq[0].T, c_final.T, z_seq[0].T


# ---------------------------------------------------------------------------
# Reference (mirrors the PyTorch module exactly) + init
# ---------------------------------------------------------------------------
def init_params(key, bottom_size, hidden_size, top_size, last_layer):
    stdv = 1.0 / math.sqrt(hidden_size)
    k1, k2, k3, k4 = jax.random.split(key, 4)
    rows = 4 * hidden_size + 1
    W_01 = jax.random.uniform(k1, (rows, bottom_size), jnp.float32, -stdv, stdv)
    U_11 = jax.random.uniform(k2, (rows, hidden_size), jnp.float32, -stdv, stdv)
    U_21 = (None if last_layer else
            jax.random.uniform(k3, (rows, top_size), jnp.float32, -stdv, stdv))
    bias = jax.random.uniform(k4, (rows, 1), jnp.float32, -stdv, stdv)
    return W_01, U_11, U_21, bias


def reference(params, c, h_bottom, h, h_top, z, z_bottom, *, a, H, last_layer):
    W_01, U_11, U_21, bias = params
    s_recur = W_01 @ h_bottom
    s_topdown = jnp.zeros_like(s_recur) if last_layer else z * (U_21 @ h_top)
    s_bottomup = z_bottom * (U_11 @ h)
    f_s = s_recur + s_topdown + s_bottomup + bias.reshape(-1, 1)
    f = jax.nn.sigmoid(f_s[0:H])
    i = jax.nn.sigmoid(f_s[H:2 * H])
    o = jax.nn.sigmoid(f_s[2 * H:3 * H])
    g = jnp.tanh(f_s[3 * H:4 * H])
    z_hat = jnp.clip((a * f_s[4 * H:4 * H + 1] + 1.0) / 2.0, 0.0, 1.0)
    ig = i * g
    c_new = z * ig + (1 - z) * (1 - z_bottom) * c + (1 - z) * z_bottom * (f * c + ig)
    t = jnp.tanh(c_new)
    h_new = z * o * t + (1 - z) * (1 - z_bottom) * h + (1 - z) * z_bottom * o * t
    z_new = (z_hat > 0.5).astype(jnp.float32)
    return h_new, c_new, z_new


if __name__ == "__main__":
    bottom_size, hidden_size, top_size = 32, 32, 32
    batch = 8
    seq_len = 8
    a = 1.0
    H = hidden_size

    root = jax.random.PRNGKey(0)

    for last_layer in (False, True):
        keys = jax.random.split(jax.random.fold_in(root, int(last_layer)), 12)
        params = init_params(keys[0], bottom_size, hidden_size, top_size, last_layer)
        prep = prepare_params(*params, hidden_size=H, last_layer=last_layer)

        # ---------------- single-step cell (module-layout API) ----------------
        c = jax.random.normal(keys[1], (H, batch), jnp.float32)
        h_bottom = jax.random.normal(keys[2], (bottom_size, batch), jnp.float32)
        h = jax.random.normal(keys[3], (H, batch), jnp.float32)
        h_top = jax.random.normal(keys[4], (top_size, batch), jnp.float32)
        z = (jax.random.uniform(keys[5], (1, batch)) > 0.5).astype(jnp.float32)
        z_bottom = (jax.random.uniform(keys[6], (1, batch)) > 0.5).astype(jnp.float32)

        h_new, c_new, z_new = jax.block_until_ready(
            hm_lstm_cell(prep, c, h_bottom, h, h_top, z, z_bottom,
                         a=a, hidden_size=H, last_layer=last_layer))
        h_r, c_r, z_r = reference(params, c, h_bottom, h, h_top, z, z_bottom,
                                  a=a, H=H, last_layer=last_layer)
        assert jnp.allclose(h_new, h_r, atol=1e-4, rtol=1e-4)
        assert jnp.allclose(c_new, c_r, atol=1e-4, rtol=1e-4)
        assert jnp.array_equal(z_new, z_r)

        # -------------- fused-sequence kernel (one pallas_call) ---------------
        hb_seq = jax.random.normal(keys[7], (seq_len, batch, bottom_size), jnp.float32)
        zb_seq = (jax.random.uniform(keys[8], (seq_len, batch, 1)) > 0.5).astype(jnp.float32)
        ht_seq = (None if last_layer else
                  jax.random.normal(keys[9], (seq_len, batch, top_size), jnp.float32))
        c0 = jax.random.normal(keys[10], (H, batch), jnp.float32)
        h0 = jax.random.normal(keys[11], (H, batch), jnp.float32)
        z0 = (jax.random.uniform(jax.random.fold_in(keys[11], 7), (1, batch))
              > 0.5).astype(jnp.float32)

        h_seq, z_seq, c_final = jax.block_until_ready(
            hm_lstm_sequence(prep, c0.T, h0.T, z0.T, hb_seq, zb_seq, ht_seq,
                             a=a, hidden_size=H, last_layer=last_layer,
                             time_block=4))

        # reference: unrolled loop over the single-step module forward
        c_ref, h_ref, z_ref = c0, h0, z0
        for t in range(seq_len):
            ht_t = (jnp.zeros((top_size, batch), jnp.float32) if last_layer
                    else ht_seq[t].T)
            h_ref, c_ref, z_ref = reference(params, c_ref, hb_seq[t].T, h_ref,
                                            ht_t, z_ref, zb_seq[t].T,
                                            a=a, H=H, last_layer=last_layer)
            assert jnp.allclose(h_seq[t], h_ref.T, atol=1e-4, rtol=1e-4)
            assert jnp.array_equal(z_seq[t], z_ref.T)
        assert jnp.allclose(c_final, c_ref.T, atol=1e-4, rtol=1e-4)

    print("KERNEL_OK")
</pallas_src>

<mosaic_0001>
module attributes {stable_mosaic.version = 11 : i64} {
  func.func @_hm_seq_kernel(%arg0: i32, %arg1: memref<65x384xf32, #tpu.memory_space<vmem>>, %arg2: memref<1x384xf32, #tpu.memory_space<vmem>>, %arg3: memref<32x128xf32, #tpu.memory_space<vmem>>, %arg4: memref<1x32xf32, #tpu.memory_space<vmem>>, %arg5: memref<8x32xf32, #tpu.memory_space<vmem>>, %arg6: memref<8x32xf32, #tpu.memory_space<vmem>>, %arg7: memref<8x1xf32, #tpu.memory_space<vmem>>, %arg8: memref<8x65xf32, #tpu.memory_space<vmem>>, %arg9: memref<1x8x128xf32, #tpu.memory_space<vmem>>, %arg10: memref<8x32xf32, #tpu.memory_space<vmem>>, %arg11: memref<8x32xf32, #tpu.memory_space<vmem>>, %arg12: memref<8x32xf32, #tpu.memory_space<vmem>>, %arg13: memref<8x1xf32, #tpu.memory_space<vmem>>) attributes {dimension_semantics = [#tpu.dimension_semantics<arbitrary>], iteration_bounds = array<i64: 1>, scalar_prefetch = 0 : i64, scratch_operands = 3 : i64, tpu.core_type = #tpu.core_type<tc>, window_params = [{pipeline_mode = #tpu.pipeline_mode<synchronous>, transform_indices = @transform_0, window_bounds = array<i64: 65, 384>}, {pipeline_mode = #tpu.pipeline_mode<synchronous>, transform_indices = @transform_1, window_bounds = array<i64: 1, 384>}, {pipeline_mode = #tpu.pipeline_mode<synchronous>, transform_indices = @transform_2, window_bounds = array<i64: 32, 128>}, {pipeline_mode = #tpu.pipeline_mode<synchronous>, transform_indices = @transform_3, window_bounds = array<i64: 1, 32>}, {pipeline_mode = #tpu.pipeline_mode<synchronous>, transform_indices = @transform_4, window_bounds = array<i64: 8, 32>}, {pipeline_mode = #tpu.pipeline_mode<synchronous>, transform_indices = @transform_5, window_bounds = array<i64: 8, 32>}, {pipeline_mode = #tpu.pipeline_mode<synchronous>, transform_indices = @transform_6, window_bounds = array<i64: 8, 1>}, {transform_indices = @transform_7, window_bounds = array<i64: 8, 65>}, {transform_indices = @transform_8, window_bounds = array<i64: 1, 8, 128>}, {pipeline_mode = #tpu.pipeline_mode<synchronous>, transform_indices = @transform_9, window_bounds = array<i64: 8, 32>}]} {
    %c0_i32 = arith.constant 0 : i32
    %0 = arith.cmpi eq, %arg0, %c0_i32 : i32
    %1 = arith.extui %0 : i1 to i32
    %c0_i32_0 = arith.constant 0 : i32
    %2 = arith.cmpi ne, %1, %c0_i32_0 : i32
    scf.if %2 {
      %c0_39 = arith.constant 0 : index
      %c0_40 = arith.constant 0 : index
      %94 = vector.load %arg5[%c0_39, %c0_40] : memref<8x32xf32, #tpu.memory_space<vmem>>, vector<8x32xf32>
      %c0_41 = arith.constant 0 : index
      %c0_42 = arith.constant 0 : index
      %95 = vector.load %arg11[%c0_41, %c0_42] : memref<8x32xf32, #tpu.memory_space<vmem>>, vector<8x32xf32>
      tpu.vector_store %arg11[%c0_41, %c0_42], %94 {strides = array<i32>} : memref<8x32xf32, #tpu.memory_space<vmem>>, vector<8x32xf32>,
      %c0_43 = arith.constant 0 : index
      %c0_44 = arith.constant 0 : index
      %96 = vector.load %arg6[%c0_43, %c0_44] : memref<8x32xf32, #tpu.memory_space<vmem>>, vector<8x32xf32>
      %c0_45 = arith.constant 0 : index
      %c0_46 = arith.constant 0 : index
      %97 = vector.load %arg12[%c0_45, %c0_46] : memref<8x32xf32, #tpu.memory_space<vmem>>, vector<8x32xf32>
      tpu.vector_store %arg12[%c0_45, %c0_46], %96 {strides = array<i32>} : memref<8x32xf32, #tpu.memory_space<vmem>>, vector<8x32xf32>,
      %c0_47 = arith.constant 0 : index
      %c0_48 = arith.constant 0 : index
      %98 = vector.load %arg7[%c0_47, %c0_48] : memref<8x1xf32, #tpu.memory_space<vmem>>, vector<8x1xf32>
      %c0_49 = arith.constant 0 : index
      %c0_50 = arith.constant 0 : index
      %99 = vector.load %arg13[%c0_49, %c0_50] : memref<8x1xf32, #tpu.memory_space<vmem>>, vector<8x1xf32>
      tpu.vector_store %arg13[%c0_49, %c0_50], %98 {strides = array<i32>} : memref<8x1xf32, #tpu.memory_space<vmem>>, vector<8x1xf32>,
    } else {
    }
    %c0 = arith.constant 0 : index
    %c0_1 = arith.constant 0 : index
    %3 = vector.load %arg8[%c0, %c0_1] : memref<8x65xf32, #tpu.memory_space<vmem>>, vector<8x65xf32>
    %c0_2 = arith.constant 0 : index
    %c0_3 = arith.constant 0 : index
    %4 = vector.load %arg1[%c0_2, %c0_3] : memref<65x384xf32, #tpu.memory_space<vmem>>, vector<65x384xf32>
    %cst = arith.constant dense<0.000000e+00> : vector<8x384xf32>
    %5 = tpu.matmul %3, %4, %cst {dimension_numbers = #tpu.dot_dimension_numbers<[1], [0], [0], [1], [0, 0, 1, 1], [], []>} : vector<8x65xf32>, vector<65x384xf32>, vector<8x384xf32> -> vector<8x384xf32>
    %c0_4 = arith.constant 0 : index
    %c0_5 = arith.constant 0 : index
    %6 = vector.load %arg2[%c0_4, %c0_5] : memref<1x384xf32, #tpu.memory_space<vmem>>, vector<1x384xf32>
    %7 = vector.broadcast %6 : vector<1x384xf32> to vector<8x384xf32>
    %8 = arith.addf %5, %7 : vector<8x384xf32>
    %c0_6 = arith.constant 0 : index
    %c0_7 = arith.constant 0 : index
    %9 = vector.load %arg3[%c0_6, %c0_7] : memref<32x128xf32, #tpu.memory_space<vmem>>, vector<32x128xf32>
    %c0_8 = arith.constant 0 : index
    %c0_9 = arith.constant 0 : index
    %10 = vector.load %arg4[%c0_8, %c0_9] : memref<1x32xf32, #tpu.memory_space<vmem>>, vector<1x32xf32>
    %c0_10 = arith.constant 0 : index
    %c0_11 = arith.constant 0 : index
    %11 = vector.load %arg11[%c0_10, %c0_11] : memref<8x32xf32, #tpu.memory_space<vmem>>, vector<8x32xf32>
    %c0_12 = arith.constant 0 : index
    %c0_13 = arith.constant 0 : index
    %12 = vector.load %arg12[%c0_12, %c0_13] : memref<8x32xf32, #tpu.memory_space<vmem>>, vector<8x32xf32>
    %c0_14 = arith.constant 0 : index
    %c0_15 = arith.constant 0 : index
    %13 = vector.load %arg13[%c0_14, %c0_15] : memref<8x1xf32, #tpu.memory_space<vmem>>, vector<8x1xf32>
    %cst_16 = arith.constant 0.000000e+00 : f32
    %14 = vector.broadcast %cst_16 : f32 to vector<8x95xf32>
    %15 = vector.extract_strided_slice %8 {offsets = [0, 0], sizes = [8, 128], strides = [1, 1]} : vector<8x384xf32> to vector<8x128xf32>
    %16 = vector.extract_strided_slice %8 {offsets = [0, 256], sizes = [8, 1], strides = [1, 1]} : vector<8x384xf32> to vector<8x1xf32>
    %17 = vector.extract_strided_slice %8 {offsets = [0, 258], sizes = [8, 1], strides = [1, 1]} : vector<8x384xf32> to vector<8x1xf32>
    %cst_17 = arith.constant dense<0.000000e+00> : vector<8x128xf32>
    %18 = tpu.matmul %12, %9, %cst_17 {dimension_numbers = #tpu.dot_dimension_numbers<[1], [0], [0], [1], [0, 0, 1, 1], [], []>} : vector<8x32xf32>, vector<32x128xf32>, vector<8x128xf32> -> vector<8x128xf32>
    %19 = vector.broadcast %10 : vector<1x32xf32> to vector<8x32xf32>
    %20 = arith.mulf %12, %19 : vector<8x32xf32>
    %cst_18 = arith.constant dense<0.000000e+00> : vector<8xf32>
    %21 = vector.multi_reduction <add>, %20, %cst_18 [1] : vector<8x32xf32> to vector<8xf32>
    %22 = vector.shape_cast %21 : vector<8xf32> to vector<8x1xf32>
    %23 = vector.broadcast %17 : vector<8x1xf32> to vector<8x128xf32>
    %24 = arith.mulf %23, %18 : vector<8x128xf32>
    %25 = arith.addf %15, %24 : vector<8x128xf32>
    %26 = arith.mulf %17, %22 : vector<8x1xf32>
    %27 = arith.addf %16, %26 : vector<8x1xf32>
    %28 = vector.extract_strided_slice %8 {offsets = [0, 128], sizes = [8, 128], strides = [1, 1]} : vector<8x384xf32> to vector<8x128xf32>
    %29 = vector.extract_strided_slice %8 {offsets = [0, 257], sizes = [8, 1], strides = [1, 1]} : vector<8x384xf32> to vector<8x1xf32>
    %30 = vector.broadcast %13 : vector<8x1xf32> to vector<8x128xf32>
    %31 = arith.mulf %30, %28 : vector<8x128xf32>
    %32 = arith.addf %25, %31 : vector<8x128xf32>
    %33 = arith.mulf %13, %29 : vector<8x1xf32>
    %34 = arith.addf %27, %33 : vector<8x1xf32>
    %35 = vector.extract_strided_slice %32 {offsets = [0, 0], sizes = [8, 96], strides = [1, 1]} : vector<8x128xf32> to vector<8x96xf32>
    %36 = arith.negf %35 : vector<8x96xf32>
    %37 = math.exp %36 : vector<8x96xf32>
    %cst_19 = arith.constant 1.000000e+00 : f32
    %38 = vector.broadcast %cst_19 : f32 to vector<8x96xf32>
    %39 = arith.addf %38, %37 : vector<8x96xf32>
    %40 = arith.divf %38, %39 : vector<8x96xf32>
    %41 = vector.extract_strided_slice %40 {offsets = [0, 0], sizes = [8, 32], strides = [1, 1]} : vector<8x96xf32> to vector<8x32xf32>
    %42 = vector.extract_strided_slice %40 {offsets = [0, 32], sizes = [8, 32], strides = [1, 1]} : vector<8x96xf32> to vector<8x32xf32>
    %43 = vector.extract_strided_slice %40 {offsets = [0, 64], sizes = [8, 32], strides = [1, 1]} : vector<8x96xf32> to vector<8x32xf32>
    %44 = vector.extract_strided_slice %32 {offsets = [0, 96], sizes = [8, 32], strides = [1, 1]} : vector<8x128xf32> to vector<8x32xf32>
    %45 = math.tanh %44 : vector<8x32xf32>
    %46 = arith.mulf %42, %45 : vector<8x32xf32>
    %cst_20 = arith.constant 1.000000e+00 : f32
    %47 = vector.broadcast %cst_20 : f32 to vector<8x1xf32>
    %48 = arith.subf %47, %13 : vector<8x1xf32>
    %cst_21 = arith.constant 1.000000e+00 : f32
    %49 = vector.broadcast %cst_21 : f32 to vector<8x1xf32>
    %50 = arith.subf %49, %17 : vector<8x1xf32>
    %51 = arith.mulf %48, %50 : vector<8x1xf32>
    %52 = arith.mulf %48, %17 : vector<8x1xf32>
    %53 = vector.broadcast %13 : vector<8x1xf32> to vector<8x32xf32>
    %54 = arith.mulf %53, %46 : vector<8x32xf32>
    %55 = vector.broadcast %51 : vector<8x1xf32> to vector<8x32xf32>
    %56 = arith.mulf %55, %11 : vector<8x32xf32>
    %57 = arith.addf %54, %56 : vector<8x32xf32>
    %58 = arith.mulf %41, %11 : vector<8x32xf32>
    %59 = arith.addf %58, %46 : vector<8x32xf32>
    %60 = vector.broadcast %52 : vector<8x1xf32> to vector<8x32xf32>
    %61 = arith.mulf %60, %59 : vector<8x32xf32>
    %62 = arith.addf %57, %61 : vector<8x32xf32>
    %63 = arith.addf %13, %52 : vector<8x1xf32>
    %64 = math.tanh %62 : vector<8x32xf32>
    %65 = arith.mulf %43, %64 : vector<8x32xf32>
    %66 = vector.broadcast %63 : vector<8x1xf32> to vector<8x32xf32>
    %67 = arith.mulf %66, %65 : vector<8x32xf32>
    %68 = vector.broadcast %51 : vector<8x1xf32> to vector<8x32xf32>
    %69 = arith.mulf %68, %12 : vector<8x32xf32>
    %70 = arith.addf %67, %69 : vector<8x32xf32>
    %cst_22 = arith.constant 1.000000e+00 : f32
    %71 = vector.broadcast %cst_22 : f32 to vector<8x1xf32>
    %72 = arith.mulf %71, %34 : vector<8x1xf32>
    %cst_23 = arith.constant 1.000000e+00 : f32
    %73 = vector.broadcast %cst_23 : f32 to vector<8x1xf32>
    %74 = arith.addf %72, %73 : vector<8x1xf32>
    %cst_24 = arith.constant 5.000000e-01 : f32
    %75 = vector.broadcast %cst_24 : f32 to vector<8x1xf32>
    %76 = arith.mulf %74, %75 : vector<8x1xf32>
    %cst_25 = arith.constant 0.000000e+00 : f32
    %cst_26 = arith.constant 1.000000e+00 : f32
    %77 = vector.broadcast %cst_25 : f32 to vector<8x1xf32>
    %78 = arith.maximumf %77, %76 : vector<8x1xf32>
    %79 = vector.broadcast %cst_26 : f32 to vector<8x1xf32>
    %80 = arith.minimumf %79, %78 : vector<8x1xf32>
    %cst_27 = arith.constant 5.000000e-01 : f32
    %81 = vector.broadcast %cst_27 : f32 to vector<8x1xf32>
    %82 = arith.cmpf ogt, %80, %81 : vector<8x1xf32>
    %83 = arith.extui %82 : vector<8x1xi1> to vector<8x1xi32>
    %84 = arith.sitofp %83 : vector<8x1xi32> to vector<8x1xf32>
    %85 = tpu.concatenate %70, %84, %14 in 1 : vector<8x32xf32>, vector<8x1xf32>, vector<8x95xf32> -> vector<8x128xf32>
    %86 = vector.shape_cast %85 : vector<8x128xf32> to vector<1x8x128xf32>
    %c0_28 = arith.constant 0 : index
    %c0_29 = arith.constant 0 : index
    %c0_30 = arith.constant 0 : index
    %87 = vector.load %arg9[%c0_28, %c0_29, %c0_30] : memref<1x8x128xf32, #tpu.memory_space<vmem>>, vector<1x8x128xf32>
    tpu.vector_store %arg9[%c0_28, %c0_29, %c0_30], %86 {strides = array<i32>} : memref<1x8x128xf32, #tpu.memory_space<vmem>>, vector<1x8x128xf32>,
    %c0_31 = arith.constant 0 : index
    %c0_32 = arith.constant 0 : index
    %88 = vector.load %arg11[%c0_31, %c0_32] : memref<8x32xf32, #tpu.memory_space<vmem>>, vector<8x32xf32>
    tpu.vector_store %arg11[%c0_31, %c0_32], %62 {strides = array<i32>} : memref<8x32xf32, #tpu.memory_space<vmem>>, vector<8x32xf32>,
    %c0_33 = arith.constant 0 : index
    %c0_34 = arith.constant 0 : index
    %89 = vector.load %arg12[%c0_33, %c0_34] : memref<8x32xf32, #tpu.memory_space<vmem>>, vector<8x32xf32>
    tpu.vector_store %arg12[%c0_33, %c0_34], %70 {strides = array<i32>} : memref<8x32xf32, #tpu.memory_space<vmem>>, vector<8x32xf32>,
    %c0_35 = arith.constant 0 : index
    %c0_36 = arith.constant 0 : index
    %90 = vector.load %arg13[%c0_35, %c0_36] : memref<8x1xf32, #tpu.memory_space<vmem>>, vector<8x1xf32>
    tpu.vector_store %arg13[%c0_35, %c0_36], %84 {strides = array<i32>} : memref<8x1xf32, #tpu.memory_space<vmem>>, vector<8x1xf32>,
    %c0_i32_37 = arith.constant 0 : i32
    %91 = arith.cmpi eq, %arg0, %c0_i32_37 : i32
    %92 = arith.extui %91 : i1 to i32
    %c0_i32_38 = arith.constant 0 : i32
    %93 = arith.cmpi ne, %92, %c0_i32_38 : i32
    scf.if %93 {
      %c0_39 = arith.constant 0 : index
      %c0_40 = arith.constant 0 : index
      %94 = vector.load %arg10[%c0_39, %c0_40] : memref<8x32xf32, #tpu.memory_space<vmem>>, vector<8x32xf32>
      tpu.vector_store %arg10[%c0_39, %c0_40], %62 {strides = array<i32>} : memref<8x32xf32, #tpu.memory_space<vmem>>, vector<8x32xf32>,
    } else {
    }
    return
  }
  func.func @transform_0(%arg0: i32) -> (i32, i32) {
    %c0_i32 = arith.constant 0 : i32
    %c0_i32_0 = arith.constant 0 : i32
    %c0_i32_1 = arith.constant 0 : i32
    return %c0_i32, %c0_i32_0 : i32, i32
  }
  func.func @transform_1(%arg0: i32) -> (i32, i32) {
    %c0_i32 = arith.constant 0 : i32
    %c0_i32_0 = arith.constant 0 : i32
    %c0_i32_1 = arith.constant 0 : i32
    return %c0_i32, %c0_i32_0 : i32, i32
  }
  func.func @transform_2(%arg0: i32) -> (i32, i32) {
    %c0_i32 = arith.constant 0 : i32
    %c0_i32_0 = arith.constant 0 : i32
    %c0_i32_1 = arith.constant 0 : i32
    return %c0_i32, %c0_i32_0 : i32, i32
  }
  func.func @transform_3(%arg0: i32) -> (i32, i32) {
    %c0_i32 = arith.constant 0 : i32
    %c0_i32_0 = arith.constant 0 : i32
    %c0_i32_1 = arith.constant 0 : i32
    return %c0_i32, %c0_i32_0 : i32, i32
  }
  func.func @transform_4(%arg0: i32) -> (i32, i32) {
    %c0_i32 = arith.constant 0 : i32
    %c0_i32_0 = arith.constant 0 : i32
    %c0_i32_1 = arith.constant 0 : i32
    return %c0_i32, %c0_i32_0 : i32, i32
  }
  func.func @transform_5(%arg0: i32) -> (i32, i32) {
    %c0_i32 = arith.constant 0 : i32
    %c0_i32_0 = arith.constant 0 : i32
    %c0_i32_1 = arith.constant 0 : i32
    return %c0_i32, %c0_i32_0 : i32, i32
  }
  func.func @transform_6(%arg0: i32) -> (i32, i32) {
    %c0_i32 = arith.constant 0 : i32
    %c0_i32_0 = arith.constant 0 : i32
    %c0_i32_1 = arith.constant 0 : i32
    return %c0_i32, %c0_i32_0 : i32, i32
  }
  func.func @transform_7(%arg0: i32) -> (i32, i32) {
    %c0_i32 = arith.constant 0 : i32
    %c0_i32_0 = arith.constant 0 : i32
    return %arg0, %c0_i32 : i32, i32
  }
  func.func @transform_8(%arg0: i32) -> (i32, i32, i32) {
    %c0_i32 = arith.constant 0 : i32
    %c0_i32_0 = arith.constant 0 : i32
    %c0_i32_1 = arith.constant 0 : i32
    return %arg0, %c0_i32, %c0_i32_0 : i32, i32, i32
  }
  func.func @transform_9(%arg0: i32) -> (i32, i32) {
    %c0_i32 = arith.constant 0 : i32
    %c0_i32_0 = arith.constant 0 : i32
    %c0_i32_1 = arith.constant 0 : i32
    return %c0_i32, %c0_i32_0 : i32, i32
  }
}

</mosaic_0001>

<llo_original>
// kernel: tpu_custom_call.1
$region0: #{tpu_custom_call.1}
  #allocation0 [shape = 'u32[]', space=smem, size = 0x4, offset = 0x4, fixed_abs, tag = 'smem constant byte address 0x4 - core index']
  #allocation1 [shape = 'u32[144,128]{1,0:T(1,128)}', space=vmem, size = 0x12000, scoped, tag = 'internal scratch']
  #allocation2 [shape = 'f32[8,32]{1,0:T(8,128)}', space=vmem, size = 0x1000, scoped, tag = 'scratch operand']
  #allocation3 [shape = 'f32[8,32]{1,0:T(8,128)}', space=vmem, size = 0x1000, scoped, tag = 'scratch operand']
  #allocation4 [shape = 'f32[8,1]{1,0:T(8,128)}', space=vmem, size = 0x1000, scoped, tag = 'scratch operand']
  %s0 = inlined_call_operand.hbm [shape: f32[65,384], index: 0, kind: input, shape index: {}]
  %s1 = inlined_call_operand.hbm [shape: f32[1,384], index: 1, kind: input, shape index: {}]
  %s2 = inlined_call_operand.hbm [shape: f32[32,128], index: 2, kind: input, shape index: {}]
  %s3 = inlined_call_operand.hbm [shape: f32[1,32], index: 3, kind: input, shape index: {}]
  %s4 = inlined_call_operand.vmem [shape: f32[8,32], index: 4, kind: input, shape index: {}]
  %s5 = inlined_call_operand.vmem [shape: f32[8,32], index: 5, kind: input, shape index: {}]
  %s6 = inlined_call_operand.vmem [shape: f32[8,1], index: 6, kind: input, shape index: {}]
  %s7 = inlined_call_operand.vmem [shape: f32[8,65], index: 7, kind: input, shape index: {}]
  %s8 = inlined_call_operand.hbm [shape: f32[1,8,128], index: 8, kind: output, shape index: {0}]
  %s9 = inlined_call_operand.hbm [shape: f32[8,32], index: 9, kind: output, shape index: {1}]
  %10 = xla_tuple %s8, %s9
  %s11 = sld [smem:[#allocation0]]
  $region74: #{tpu_custom_call.1} parent=0
    _
  %s13 = ssub.s32 1, %s11
  %s14 = scalar_select 0, %s13, %s11
  $region1: #{tpu_custom_call.1} parent=0
    #allocation5 [shape = 'u8[110592]{0}', space=vmem, size = 0x1b000, scoped, tag = 'input window, operand 0, single buffered']
    #allocation6 [shape = 's32[1]{0}', space=sflag, size = 0x4, scoped, tag = 'scoped memory for tpu_custom_call.1']
    #allocation7 [shape = 's32[1]{0}', space=sflag, size = 0x4, scoped, tag = 'scoped memory for tpu_custom_call.1']
    #allocation8 [shape = 'u8[1536]{0}', space=vmem, size = 0x800, scoped, tag = 'input window, operand 1, single buffered']
    #allocation9 [shape = 's32[1]{0}', space=sflag, size = 0x4, scoped, tag = 'scoped memory for tpu_custom_call.1']
    #allocation10 [shape = 'u8[16384]{0}', space=vmem, size = 0x4000, scoped, tag = 'input window, operand 2, single buffered']
    #allocation11 [shape = 'u8[512]{0}', space=vmem, size = 0x400, scoped, tag = 'input window, operand 3, single buffered']
    #allocation12 [shape = 's32[1]{0}', space=sflag, size = 0x4, scoped, tag = 'scoped memory for tpu_custom_call.1']
    #allocation13 [shape = 'u8[4096]{0}', space=vmem, size = 0x1000, scoped, tag = 'output window, operand 0, single buffered']
    #allocation14 [shape = 'u8[4096]{0}', space=vmem, size = 0x1000, scoped, tag = 'output window, operand 1, single buffered']
    #allocation15 [shape = 's32[1]{0}', space=sflag, size = 0x4, scoped, tag = 'scoped memory for tpu_custom_call.1']
    %15 = vsyncpa [#allocation6], 0
    %16 = vsyncpa [#allocation9], 0
    %17 = vsyncpa [#allocation12], 0
    %18 = vsyncpa [#allocation7], 0
    %19 = vsyncpa [#allocation15], 0
    // Predicated region
    $region2: #{tpu_custom_call.1} parent=1 // pred_check
      _
    $region3: #{tpu_custom_call.1} parent=1 // pred_check_branch
      %21 = sbr.rel (0) target = $region5
    $region4: #{tpu_custom_call.1} parent=1 // pred_region
      %s23 = ssub.s32 3456, 3456
      %24 = vsyncadd [#allocation6], %s23
      %s25 = sshll.u32 [#allocation5], 4
      %s26 = int_to_ptr.vmem [resolvable:$true] %s25
      %31 = dma.hbm_to_vmem [thread:$0]  %s0, 3456, %s26, [#allocation6], 384, 384, 24
    $region5: #{tpu_custom_call.1} parent=1 // pred_fallthru
      _
    // Predicated region
    $region6: #{tpu_custom_call.1} parent=1 // pred_check
      _
    $region7: #{tpu_custom_call.1} parent=1 // pred_check_branch
      %33 = sbr.rel (0) target = $region9
    $region8: #{tpu_custom_call.1} parent=1 // pred_region
      %s35 = ssub.s32 48, 48
      %36 = vsyncadd [#allocation9], %s35
      %s38 = sshll.u32 [#allocation8], 4
      %s39 = int_to_ptr.vmem [resolvable:$true] %s38
      %41 = dma.hbm_to_vmem [thread:$0]  %s1, 48, %s39, [#allocation9]
    $region9: #{tpu_custom_call.1} parent=1 // pred_fallthru
      _
    // Predicated region
    $region10: #{tpu_custom_call.1} parent=1 // pred_check
      _
    $region11: #{tpu_custom_call.1} parent=1 // pred_check_branch
      %43 = sbr.rel (0) target = $region13
    $region12: #{tpu_custom_call.1} parent=1 // pred_region
      %s45 = ssub.s32 512, 512
      %46 = vsyncadd [#allocation9], %s45
      %s47 = sshll.u32 [#allocation10], 4
      %s48 = int_to_ptr.vmem [resolvable:$true] %s47
      %53 = dma.hbm_to_vmem [thread:$0]  %s2, 512, %s48, [#allocation9], 128, 128, 8
    $region13: #{tpu_custom_call.1} parent=1 // pred_fallthru
      _
    // Predicated region
    $region14: #{tpu_custom_call.1} parent=1 // pred_check
      _
    $region15: #{tpu_custom_call.1} parent=1 // pred_check_branch
      %55 = sbr.rel (0) target = $region17
    $region16: #{tpu_custom_call.1} parent=1 // pred_region
      %s57 = ssub.s32 16, 16
      %58 = vsyncadd [#allocation12], %s57
      %s60 = sshll.u32 [#allocation11], 4
      %s61 = int_to_ptr.vmem [resolvable:$true] %s60
      %63 = dma.hbm_to_vmem [thread:$0]  %s3, 16, %s61, [#allocation12]
    $region17: #{tpu_custom_call.1} parent=1 // pred_fallthru
      _
    // Predicated region
    $region18: #{tpu_custom_call.1} parent=1 // pred_check
      _
    $region19: #{tpu_custom_call.1} parent=1 // pred_check_branch
      %65 = sbr.rel (0) target = $region21
    $region20: #{tpu_custom_call.1} parent=1 // pred_region
      _
    $region21: #{tpu_custom_call.1} parent=1 // pred_fallthru
      _
    // Predicated region
    $region22: #{tpu_custom_call.1} parent=1 // pred_check
      _
    $region23: #{tpu_custom_call.1} parent=1 // pred_check_branch
      %67 = sbr.rel (0) target = $region25
    $region24: #{tpu_custom_call.1} parent=1 // pred_region
      _
    $region25: #{tpu_custom_call.1} parent=1 // pred_fallthru
      _
    // Predicated region
    $region26: #{tpu_custom_call.1} parent=1 // pred_check
      _
    $region27: #{tpu_custom_call.1} parent=1 // pred_check_branch
      %69 = sbr.rel (0) target = $region29
    $region28: #{tpu_custom_call.1} parent=1 // pred_region
      _
    $region29: #{tpu_custom_call.1} parent=1 // pred_fallthru
      _
    // Predicated region
    $region30: #{tpu_custom_call.1} parent=1 // pred_check
      _
    $region31: #{tpu_custom_call.1} parent=1 // pred_check_branch
      %71 = sbr.rel (0) target = $region33
    $region32: #{tpu_custom_call.1} parent=1 // pred_region
      _
    $region33: #{tpu_custom_call.1} parent=1 // pred_fallthru
      _
    // Predicated region
    $region34: #{tpu_custom_call.1} parent=1 // pred_check
      _
    $region35: #{tpu_custom_call.1} parent=1 // pred_check_branch
      %73 = sbr.rel (0) target = $region37
    $region36: #{tpu_custom_call.1} parent=1 // pred_region
      %74 = dma.done [#allocation6], 3456
    $region37: #{tpu_custom_call.1} parent=1 // pred_fallthru
      _
    // Predicated region
    $region38: #{tpu_custom_call.1} parent=1 // pred_check
      _
    $region39: #{tpu_custom_call.1} parent=1 // pred_check_branch
      %76 = sbr.rel (0) target = $region41
    $region40: #{tpu_custom_call.1} parent=1 // pred_region
      %77 = dma.done [#allocation9], 48
    $region41: #{tpu_custom_call.1} parent=1 // pred_fallthru
      _
    // Predicated region
    $region42: #{tpu_custom_call.1} parent=1 // pred_check
      _
    $region43: #{tpu_custom_call.1} parent=1 // pred_check_branch
      %79 = sbr.rel (0) target = $region45
    $region44: #{tpu_custom_call.1} parent=1 // pred_region
      %80 = dma.done [#allocation9], 512
    $region45: #{tpu_custom_call.1} parent=1 // pred_fallthru
      _
    // Predicated region
    $region46: #{tpu_custom_call.1} parent=1 // pred_check
      _
    $region47: #{tpu_custom_call.1} parent=1 // pred_check_branch
      %82 = sbr.rel (0) target = $region49
    $region48: #{tpu_custom_call.1} parent=1 // pred_region
      %83 = dma.done [#allocation12], 16
    $region49: #{tpu_custom_call.1} parent=1 // pred_fallthru
      _
    %p84 = scmp.eq.s32.totalorder 0, 0
    // Predicated region
    $region50: #{tpu_custom_call.1} parent=1 // pred_check
      %p85 = pneg %p84
    $region51: #{tpu_custom_call.1} parent=1 // pred_check_branch
      %87 = sbr.rel (%p85) target = $region53
    $region52: #{tpu_custom_call.1} parent=1 // pred_region
      %v88 = vld [vmem:[%s4] sm:$0xff]
      %vm89 = vcmask 261120
      %90 = vst.msk [vmem:[#allocation2] sm:$0xff] %vm89, %v88
      %v91 = vld [vmem:[%s5] sm:$0xff]
      %92 = vst.msk [vmem:[#allocation3] sm:$0xff] %vm89, %v91
      %v93 = vld [vmem:[%s6] sm:$0xff]
      %vm94 = vcmask 7168
      %95 = vst.msk [vmem:[#allocation4] sm:$0xff] %vm94, %v93
    $region53: #{tpu_custom_call.1} parent=1 // pred_fallthru
      _
    %v96 = vld [vmem:[%s7] sm:$0xff]
    %v97 = vld [vmem:[#allocation5] sm:$0xff]
    %v98 = vld [vmem:[#allocation5 + $0x8] sm:$0xff]
    %v99 = vld [vmem:[#allocation5 + $0x10] sm:$0xff]
    %v100 = vld [vmem:[#allocation5 + $0x18] sm:$0xff]
    %v101 = vld [vmem:[#allocation5 + $0x20] sm:$0xff]
    %v102 = vld [vmem:[#allocation5 + $0x28] sm:$0xff]
    %v103 = vld [vmem:[#allocation5 + $0x30] sm:$0xff]
    %v104 = vld [vmem:[#allocation5 + $0x38] sm:$0xff]
    %v105 = vld [vmem:[#allocation5 + $0x40] sm:$0xff]
    %v106 = vld [vmem:[#allocation5 + $0x48] sm:$0xff]
    %v107 = vld [vmem:[#allocation5 + $0x50] sm:$0xff]
    %v108 = vld [vmem:[#allocation5 + $0x58] sm:$0xff]
    %v109 = vld [vmem:[#allocation5 + $0x60] sm:$0xff]
    %v110 = vld [vmem:[#allocation5 + $0x68] sm:$0xff]
    %v111 = vld [vmem:[#allocation5 + $0x70] sm:$0xff]
    %v112 = vld [vmem:[#allocation5 + $0x78] sm:$0xff]
    %v113 = vld [vmem:[#allocation5 + $0x80] sm:$0xff]
    %v114 = vld [vmem:[#allocation5 + $0x88] sm:$0xff]
    %v115 = vld [vmem:[#allocation5 + $0x90] sm:$0xff]
    %v116 = vld [vmem:[#allocation5 + $0x98] sm:$0xff]
    %v117 = vld [vmem:[#allocation5 + $0xa0] sm:$0xff]
    %v118 = vld [vmem:[#allocation5 + $0xa8] sm:$0xff]
    %v119 = vld [vmem:[#allocation5 + $0xb0] sm:$0xff]
    %v120 = vld [vmem:[#allocation5 + $0xb8] sm:$0xff]
    %v121 = vld [vmem:[#allocation5 + $0xc0] sm:$0x1]
    %v122 = vld [vmem:[#allocation5 + $0xc8] sm:$0x1]
    %v123 = vld [vmem:[#allocation5 + $0xd0] sm:$0x1]
    %v124 = vld [vmem:[#allocation8] sm:$0x7]
    %v126 = vlaneseq
    %v127 = vshrl.u32 %v126, 7
    %v128 = vsub.s32 0, %v127
    %v129 = vrot.slane %v124, %v128
    %v130 = vlaneseq
    %v131 = vshrl.u32 %v130, 7
    %v132 = vsub.s32 1, %v131
    %v133 = vrot.slane %v124, %v132
    %v134 = vlaneseq
    %v135 = vshrl.u32 %v134, 7
    %v136 = vsub.s32 2, %v135
    %v137 = vrot.slane %v124, %v136
    %vm141 = vcmask 531456
    %v143 = vsel %vm141, %v96, 0
    %vm145 = vcmask 1040384
    %v147 = vsel %vm145, %v121, 0
    %v150 = vsel %vm145, %v122, 0
    %v153 = vsel %vm145, %v123, 0
    %155 = vmatprep.subr.mxu0 %v98
    %156 = vmatpush1.msra.mxu0 %v97
    %157 = vmatprep.subr.mxu0 %v101
    %158 = vmatpush1.msra.mxu0 %v100
    %159 = vmatprep.subr.mxu0 %v104
    %160 = vmatpush1.msra.mxu0 %v103
    %161 = vmatprep.subr.mxu0 %v107
    %162 = vmatpush1.msra.mxu0 %v106
    %163 = vmatprep.subr.mxu0 %v110
    %164 = vmatpush1.msra.mxu0 %v109
    %165 = vmatprep.subr.mxu0 %v113
    %166 = vmatpush1.msra.mxu0 %v112
    %167 = vmatprep.subr.mxu0 %v116
    %168 = vmatpush1.msra.mxu0 %v115
    %169 = vmatprep.subr.mxu0 %v119
    %170 = vmatpush1.msra.mxu0 %v118
    %171 = vmatprep.subr.mxu0 %v150
    %172 = vmatpush1.msra.mxu0 %v147
    %173 = vmatprep.subr.mxu0 0.0
    %174 = vmatpush1.msra.mxu0 0.0
    %175 = vmatprep.subr.mxu0 0.0
    %176 = vmatpush1.msra.mxu0 0.0
    %177 = vmatprep.subr.mxu0 0.0
    %178 = vmatpush1.msra.mxu0 0.0
    %179 = vmatprep.subr.mxu0 0.0
    %180 = vmatpush1.msra.mxu0 0.0
    %181 = vmatprep.subr.mxu0 0.0
    %182 = vmatpush1.msra.mxu0 0.0
    %183 = vmatprep.subr.mxu0 0.0
    %184 = vmatpush1.msra.mxu0 0.0
    %185 = vmatprep.subr.mxu0 0.0
    %186 = vmatpush1.msra.mxu0 0.0
    %187 = vmatprep.subr.mxu0 0.0
    %188 = vmatpush1.msra.mxu0 0.0
    %189 = vmatprep.subr.mxu0 0.0
    %190 = vmatpush1.msra.mxu0 0.0
    %191 = vmatprep.subr.mxu0 0.0
    %192 = vmatpush1.msra.mxu0 0.0
    %193 = vmatprep.subr.mxu0 0.0
    %194 = vmatpush1.msra.mxu0 0.0
    %195 = vmatprep.subr.mxu0 0.0
    %196 = vmatpush1.msra.mxu0 0.0
    %197 = vmatprep.subr.mxu0 0.0
    %198 = vmatpush1.msra.mxu0 0.0
    %199 = vmatprep.subr.mxu0 0.0
    %200 = vmatpush1.msra.mxu0 0.0
    %201 = vmatprep.subr.mxu0 0.0
    %202 = vmatpush1.msra.mxu0 0.0
    %203 = vmatprep.subr.mxu0 0.0
    %204 = vmatpush1.msra.mxu0 0.0
    %205 = vmatprep.subr.mxu0 0.0
    %206 = vmatpush1.msra.mxu0 0.0
    %207 = vmatprep.subr.mxu0 0.0
    %208 = vmatpush1.msra.mxu0 0.0
    %209 = vmatprep.subr.mxu0 0.0
    %210 = vmatpush1.msra.mxu0 0.0
    %211 = vmatprep.subr.mxu0 0.0
    %212 = vmatpush1.msra.mxu0 0.0
    %213 = vmatprep.subr.mxu0 0.0
    %214 = vmatpush1.msra.mxu0 0.0
    %215 = vmatprep.subr.mxu0 0.0
    %216 = vmatpush1.msra.mxu0 0.0
    %217 = vmatprep.subr.mxu0 0.0
    %218 = vmatpush1.msra.mxu0 0.0
    %219 = vmatprep.mubr.f32.mxu0 0.0
    %220 = vmatmul.mubr.f32.gmra.mrb[0].mxu0 %v143
    %v221 = vpop.f32.mrb[0].mxu0
    %v222 = vadd.f32 %v129, %v221
    %v223 = vpop.f32.mrb[0].mxu0
    %v224 = vadd.f32 %v133, %v223
    %225 = vdwg.mxu0
    %226 = vmatprep.subr.mxu0 0.0
    %227 = vmatpush1.msra.mxu0 %v99
    %228 = vmatprep.subr.mxu0 0.0
    %229 = vmatpush1.msra.mxu0 %v102
    %230 = vmatprep.subr.mxu0 0.0
    %231 = vmatpush1.msra.mxu0 %v105
    %232 = vmatprep.subr.mxu0 0.0
    %233 = vmatpush1.msra.mxu0 %v108
    %234 = vmatprep.subr.mxu0 0.0
    %235 = vmatpush1.msra.mxu0 %v111
    %236 = vmatprep.subr.mxu0 0.0
    %237 = vmatpush1.msra.mxu0 %v114
    %238 = vmatprep.subr.mxu0 0.0
    %239 = vmatpush1.msra.mxu0 %v117
    %240 = vmatprep.subr.mxu0 0.0
    %241 = vmatpush1.msra.mxu0 %v120
    %242 = vmatprep.subr.mxu0 0.0
    %243 = vmatpush1.msra.mxu0 %v153
    %244 = vmatprep.subr.mxu0 0.0
    %245 = vmatpush1.msra.mxu0 0.0
    %246 = vmatprep.subr.mxu0 0.0
    %247 = vmatpush1.msra.mxu0 0.0
    %248 = vmatprep.subr.mxu0 0.0
    %249 = vmatpush1.msra.mxu0 0.0
    %250 = vmatprep.subr.mxu0 0.0
    %251 = vmatpush1.msra.mxu0 0.0
    %252 = vmatprep.subr.mxu0 0.0
    %253 = vmatpush1.msra.mxu0 0.0
    %254 = vmatprep.subr.mxu0 0.0
    %255 = vmatpush1.msra.mxu0 0.0
    %256 = vmatprep.subr.mxu0 0.0
    %257 = vmatpush1.msra.mxu0 0.0
    %258 = vmatprep.subr.mxu0 0.0
    %259 = vmatpush1.msra.mxu0 0.0
    %260 = vmatprep.subr.mxu0 0.0
    %261 = vmatpush1.msra.mxu0 0.0
    %262 = vmatprep.subr.mxu0 0.0
    %263 = vmatpush1.msra.mxu0 0.0
    %264 = vmatprep.subr.mxu0 0.0
    %265 = vmatpush1.msra.mxu0 0.0
    %266 = vmatprep.subr.mxu0 0.0
    %267 = vmatpush1.msra.mxu0 0.0
    %268 = vmatprep.subr.mxu0 0.0
    %269 = vmatpush1.msra.mxu0 0.0
    %270 = vmatprep.subr.mxu0 0.0
    %271 = vmatpush1.msra.mxu0 0.0
    %272 = vmatprep.subr.mxu0 0.0
    %273 = vmatpush1.msra.mxu0 0.0
    %274 = vmatprep.subr.mxu0 0.0
    %275 = vmatpush1.msra.mxu0 0.0
    %276 = vmatprep.subr.mxu0 0.0
    %277 = vmatpush1.msra.mxu0 0.0
    %278 = vmatprep.subr.mxu0 0.0
    %279 = vmatpush1.msra.mxu0 0.0
    %280 = vmatprep.subr.mxu0 0.0
    %281 = vmatpush1.msra.mxu0 0.0
    %282 = vmatprep.subr.mxu0 0.0
    %283 = vmatpush1.msra.mxu0 0.0
    %284 = vmatprep.subr.mxu0 0.0
    %285 = vmatpush1.msra.mxu0 0.0
    %286 = vmatprep.subr.mxu0 0.0
    %287 = vmatpush1.msra.mxu0 0.0
    %288 = vmatprep.subr.mxu0 0.0
    %289 = vmatpush1.msra.mxu0 0.0
    %290 = vmatprep.mubr.f32.mxu0 0.0
    %291 = vmatmul.mubr.f32.gmra.mrb[0].mxu0 %v143
    %v292 = vpop.f32.mrb[0].mxu0
    %v293 = vadd.f32 %v137, %v292
    %v294 = vpop.f32.mrb[0].mxu0
    %295 = vdwg.mxu0
    %v296 = vld [vmem:[#allocation10] sm:$0xff]
    %v297 = vld [vmem:[#allocation10 + $0x8] sm:$0xff]
    %v298 = vld [vmem:[#allocation10 + $0x10] sm:$0xff]
    %v299 = vld [vmem:[#allocation10 + $0x18] sm:$0xff]
    %v300 = vld [vmem:[#allocation11] sm:$0x1]
    %v301 = vld [vmem:[#allocation2] sm:$0xff]
    %v302 = vld [vmem:[#allocation3] sm:$0xff]
    %v303 = vld [vmem:[#allocation4] sm:$0xff]
    %vm304 = vcmask 261120
    %v306 = vsel %vm304, %v302, 0
    %308 = vmatprep.subr.mxu0 0.0
    %309 = vmatpush1.msra.mxu0 %v296
    %310 = vmatprep.subr.mxu0 0.0
    %311 = vmatpush1.msra.mxu0 %v297
    %312 = vmatprep.subr.mxu0 0.0
    %313 = vmatpush1.msra.mxu0 %v298
    %314 = vmatprep.subr.mxu0 0.0
    %315 = vmatpush1.msra.mxu0 %v299
    %316 = vmatprep.subr.mxu0 0.0
    %317 = vmatpush1.msra.mxu0 0.0
    %318 = vmatprep.subr.mxu0 0.0
    %319 = vmatpush1.msra.mxu0 0.0
    %320 = vmatprep.subr.mxu0 0.0
    %321 = vmatpush1.msra.mxu0 0.0
    %322 = vmatprep.subr.mxu0 0.0
    %323 = vmatpush1.msra.mxu0 0.0
    %324 = vmatprep.subr.mxu0 0.0
    %325 = vmatpush1.msra.mxu0 0.0
    %326 = vmatprep.subr.mxu0 0.0
    %327 = vmatpush1.msra.mxu0 0.0
    %328 = vmatprep.subr.mxu0 0.0
    %329 = vmatpush1.msra.mxu0 0.0
    %330 = vmatprep.subr.mxu0 0.0
    %331 = vmatpush1.msra.mxu0 0.0
    %332 = vmatprep.subr.mxu0 0.0
    %333 = vmatpush1.msra.mxu0 0.0
    %334 = vmatprep.subr.mxu0 0.0
    %335 = vmatpush1.msra.mxu0 0.0
    %336 = vmatprep.subr.mxu0 0.0
    %337 = vmatpush1.msra.mxu0 0.0
    %338 = vmatprep.subr.mxu0 0.0
    %339 = vmatpush1.msra.mxu0 0.0
    %340 = vmatprep.subr.mxu0 0.0
    %341 = vmatpush1.msra.mxu0 0.0
    %342 = vmatprep.subr.mxu0 0.0
    %343 = vmatpush1.msra.mxu0 0.0
    %344 = vmatprep.subr.mxu0 0.0
    %345 = vmatpush1.msra.mxu0 0.0
    %346 = vmatprep.subr.mxu0 0.0
    %347 = vmatpush1.msra.mxu0 0.0
    %348 = vmatprep.subr.mxu0 0.0
    %349 = vmatpush1.msra.mxu0 0.0
    %350 = vmatprep.subr.mxu0 0.0
    %351 = vmatpush1.msra.mxu0 0.0
    %352 = vmatprep.subr.mxu0 0.0
    %353 = vmatpush1.msra.mxu0 0.0
    %354 = vmatprep.subr.mxu0 0.0
    %355 = vmatpush1.msra.mxu0 0.0
    %356 = vmatprep.subr.mxu0 0.0
    %357 = vmatpush1.msra.mxu0 0.0
    %358 = vmatprep.subr.mxu0 0.0
    %359 = vmatpush1.msra.mxu0 0.0
    %360 = vmatprep.subr.mxu0 0.0
    %361 = vmatpush1.msra.mxu0 0.0
    %362 = vmatprep.subr.mxu0 0.0
    %363 = vmatpush1.msra.mxu0 0.0
    %364 = vmatprep.subr.mxu0 0.0
    %365 = vmatpush1.msra.mxu0 0.0
    %366 = vmatprep.subr.mxu0 0.0
    %367 = vmatpush1.msra.mxu0 0.0
    %368 = vmatprep.subr.mxu0 0.0
    %369 = vmatpush1.msra.mxu0 0.0
    %370 = vmatprep.subr.mxu0 0.0
    %371 = vmatpush1.msra.mxu0 0.0
    %372 = vmatprep.mubr.f32.mxu0 0.0
    %373 = vmatmul.mubr.f32.gmra.mrb[0].mxu0 %v306
    %v374 = vpop.f32.mrb[0].mxu0
    %v375 = vadd.f32 0.0, %v374
    %v376 = vpop.f32.mrb[0].mxu0
    %377 = vdwg.mxu0
    %v379 = vlaneseq
    %v380 = vshrl.u32 %v379, 7
    %v381 = vsub.s32 0, %v380
    %v382 = vrot.slane %v300, %v381
    %v384 = vmul.f32 %v302, %v382
    %v385 = vsel %vm304, %v384, 0.0
    %386 = vadd.xlane.f32.xlu0 %v385
    %v387 = vpop.xlane.xlu0 %386
    %389 = vset.pattern.permute.xlu0 2
    %390 = vperm.xlu0 %389, %v293
    %v391 = vpop.permute.xlu0 %390
    %v393 = vmul.f32 %v391, %v375
    %v394 = vadd.f32 %v222, %v393
    %v395 = vmul.f32 %v293, %v387
    %397 = vrot.lane.b32.xlu0 %v395, 126
    %v398 = vpop.permute.xlu0 %397
    %v400 = vadd.f32 %v293, %v398
    %402 = vset.pattern.permute.xlu0 0
    %403 = vperm.xlu0 %402, %v303
    %v404 = vpop.permute.xlu0 %403
    %v406 = vmul.f32 %v404, %v224
    %v407 = vadd.f32 %v394, %v406
    %408 = vrot.lane.b32.xlu0 %v293, 127
    %v409 = vpop.permute.xlu0 %408
    %v411 = vmul.f32 %v303, %v409
    %v412 = vadd.f32 %v400, %v411
    %v413 = vxor.u32 %v407, 2147483648
    %v414 = vmul.f32 %v413, 1.442695
    %v415 = vpow.pop %v414
    %v416 = vadd.f32 %v415, 1.0
    %v417 = vrcp.pop %v416
    %v418 = vmul.f32 1.0, %v417
    %v419 = vtanh.pop %v407
    %421 = vrot.lane.b32.xlu0 %v419, 64
    %v422 = vpop.permute.xlu0 %421
    %v424 = vmul.f32 %v418, %v422
    %v425 = vsub.f32 1.0, %v303
    %v426 = vsub.f32 1.0, %v293
    %428 = vrot.lane.b32.xlu0 %v426, 126
    %v429 = vpop.permute.xlu0 %428
    %v431 = vmul.f32 %v425, %v429
    %432 = vrot.lane.b32.xlu0 %v293, 126
    %v433 = vpop.permute.xlu0 %432
    %v435 = vmul.f32 %v425, %v433
    %v436 = vmul.f32 %v404, %v424
    %438 = vset.pattern.permute.xlu0 0
    %439 = vperm.xlu0 %438, %v431
    %v440 = vpop.permute.xlu0 %439
    %v442 = vmul.f32 %v440, %v301
    %444 = vrot.lane.b32.xlu0 %v442, 32
    %v445 = vpop.permute.xlu0 %444
    %v447 = vadd.f32 %v436, %v445
    %v448 = vmul.f32 %v418, %v301
    %450 = vrot.lane.b32.xlu0 %v424, 96
    %v451 = vpop.permute.xlu0 %450
    %v453 = vadd.f32 %v448, %v451
    %455 = vset.pattern.permute.xlu0 0
    %456 = vperm.xlu0 %455, %v435
    %v457 = vpop.permute.xlu0 %456
    %v459 = vmul.f32 %v457, %v453
    %461 = vrot.lane.b32.xlu0 %v459, 32
    %v462 = vpop.permute.xlu0 %461
    %v464 = vadd.f32 %v447, %v462
    %v465 = vadd.f32 %v303, %v435
    %v466 = vtanh.pop %v464
    %468 = vrot.lane.b32.xlu0 %v466, 32
    %v469 = vpop.permute.xlu0 %468
    %v471 = vmul.f32 %v418, %v469
    %473 = vset.pattern.permute.xlu0 0
    %474 = vperm.xlu0 %473, %v465
    %v475 = vpop.permute.xlu0 %474
    %v477 = vmul.f32 %v475, %v471
    %v478 = vmul.f32 %v440, %v302
    %480 = vrot.lane.b32.xlu0 %v478, 64
    %v481 = vpop.permute.xlu0 %480
    %v483 = vadd.f32 %v477, %v481
    %v484 = vadd.f32 %v412, 1.0
    %v485 = vmul.f32 %v484, 0.5
    %v486 = vmax.f32 %v485, 0.0
    %v487 = vmin.f32 %v486, 1.0
    %vm488 = vcmp.gt.f32.partialorder %v487, 0.5
    %v489 = vsel %vm488, 1, 0
    %v490 = vcvt.s32.f32 %v489
    %492 = vrot.lane.b32.xlu0 %v483, 64
    %v493 = vpop.permute.xlu0 %492
    %496 = vrot.lane.b32.xlu0 %v490, 32
    %v497 = vpop.permute.xlu0 %496
    %v499 = vsel %vm304, %v493, %v497
    %vm500 = vcmask 269312
    %v501 = vsel %vm500, %v499, 0.0
    %502 = vst [vmem:[#allocation13] sm:$0xff] %v501
    %504 = vrot.lane.b32.xlu0 %v464, 96
    %v505 = vpop.permute.xlu0 %504
    %507 = vst.msk [vmem:[#allocation2] sm:$0xff] %vm304, %v505
    %508 = vst.msk [vmem:[#allocation3] sm:$0xff] %vm304, %v493
    %vm509 = vcmask 7168
    %510 = vst.msk [vmem:[#allocation4] sm:$0xff] %vm509, %v490
    // Predicated region
    $region54: #{tpu_custom_call.1} parent=1 // pred_check
      %p511 = pneg %p84
    $region55: #{tpu_custom_call.1} parent=1 // pred_check_branch
      %513 = sbr.rel (%p511) target = $region57
    $region56: #{tpu_custom_call.1} parent=1 // pred_region
      %514 = vst.msk [vmem:[#allocation14] sm:$0xff] %vm304, %v505
    $region57: #{tpu_custom_call.1} parent=1 // pred_fallthru
      _
    // Predicated region
    $region58: #{tpu_custom_call.1} parent=1 // pred_check
      _
    $region59: #{tpu_custom_call.1} parent=1 // pred_check_branch
      %516 = sbr.rel (0) target = $region61
    $region60: #{tpu_custom_call.1} parent=1 // pred_region
      %s518 = ssub.s32 128, 128
      %519 = vsyncadd [#allocation7], %s518
      %s521 = sshll.u32 [#allocation13], 4
      %s522 = int_to_ptr.vmem [resolvable:$true] %s521
      %524 = dma.vmem_to_hbm [thread:$0]  %s522, 128, %s8, [#allocation7]
    $region61: #{tpu_custom_call.1} parent=1 // pred_fallthru
      _
    // Predicated region
    $region62: #{tpu_custom_call.1} parent=1 // pred_check
      _
    $region63: #{tpu_custom_call.1} parent=1 // pred_check_branch
      %526 = sbr.rel (0) target = $region65
    $region64: #{tpu_custom_call.1} parent=1 // pred_region
      %s528 = ssub.s32 128, 128
      %529 = vsyncadd [#allocation15], %s528
      %s531 = sshll.u32 [#allocation14], 4
      %s532 = int_to_ptr.vmem [resolvable:$true] %s531
      %534 = dma.vmem_to_hbm [thread:$0]  %s532, 128, %s9, [#allocation15]
    $region65: #{tpu_custom_call.1} parent=1 // pred_fallthru
      _
    // Predicated region
    $region66: #{tpu_custom_call.1} parent=1 // pred_check
      _
    $region67: #{tpu_custom_call.1} parent=1 // pred_check_branch
      %536 = sbr.rel (0) target = $region69
    $region68: #{tpu_custom_call.1} parent=1 // pred_region
      %537 = dma.done [#allocation7], 128
    $region69: #{tpu_custom_call.1} parent=1 // pred_fallthru
      _
    // Predicated region
    $region70: #{tpu_custom_call.1} parent=1 // pred_check
      _
    $region71: #{tpu_custom_call.1} parent=1 // pred_check_branch
      %539 = sbr.rel (0) target = $region73
    $region72: #{tpu_custom_call.1} parent=1 // pred_region
      %540 = dma.done [#allocation15], 128
    $region73: #{tpu_custom_call.1} parent=1 // pred_fallthru
      _
    %541 = vsyncpa [#allocation6], 1
    %542 = vsyncpa [#allocation9], 1
    %543 = vsyncpa [#allocation12], 1
    %544 = vsyncpa [#allocation7], 1
    %545 = vsyncpa [#allocation15], 1

</llo_original>
